<compile_context>
chip_gen: v6e
topology: v6e:2x2x1
jax: 0.10.0
libtpu: 0.0.40
codegen_flags: <defaults>
</compile_context>

<pallas_src>
import jax
import jax.numpy as jnp
from jax.experimental import pallas as pl
from jax.experimental.pallas import tpu as pltpu


_LOG_CLAMP = -100.0   # torch.nn.BCELoss clamps each log term at -100
_LANES = 128          # vreg lane width
_SUBLANES = 8         # vreg sublane count

_SINGLE_BLOCK_MAX_ROWS = 4096   # <= 2 MiB per f32 input block -> single grid step
_TILE_ROWS = 4096               # 2 MiB per f32 input tile; 2 inputs x 2 bufs = 8 MiB VMEM
_VMEM_LIMIT = 32 * 1024 * 1024  # explicit scoped-VMEM request (safe on v5e/v6e/v7x)


def _bce_block(o, t):
    """Elementwise clamped BCE for one block, computed in f32.

    Folded form of -(t*log(o) + (1-t)*log(1-o)) with per-term clamping at -100
    (identical to torch). Pad elements (o=1, t=1) contribute exactly 0.
    """
    o = o.astype(jnp.float32)
    t = t.astype(jnp.float32)
    log_o = jnp.maximum(jnp.log(o), _LOG_CLAMP)
    log_1mo = jnp.maximum(jnp.log(1.0 - o), _LOG_CLAMP)
    return -(t * (log_o - log_1mo) + log_1mo)


# ---------------------------------------------------------------------------
# Single-block path (small inputs, the module's common case): one grid step,
# no accumulator, no phase gates. Emits the BCE element sum as a (1,1) scalar.
# ---------------------------------------------------------------------------
def _single_block_call(shape2d):
    M, N = shape2d

    def kernel(o_ref, t_ref, out_ref):
        out_ref[0, 0] = jnp.sum(_bce_block(o_ref[...], t_ref[...]))

    return pl.pallas_call(
        kernel,
        out_shape=jax.ShapeDtypeStruct((1, 1), jnp.float32),
        grid_spec=pltpu.PrefetchScalarGridSpec(
            num_scalar_prefetch=0,
            grid=(1,),
            in_specs=[
                pl.BlockSpec((M, N), lambda i: (0, 0)),
                pl.BlockSpec((M, N), lambda i: (0, 0)),
            ],
            out_specs=pl.BlockSpec(memory_space=pltpu.SMEM),
        ),
        compiler_params=pltpu.CompilerParams(
            dimension_semantics=("arbitrary",),
            vmem_limit_bytes=_VMEM_LIMIT,
        ),
    )


# ---------------------------------------------------------------------------
# Tiled path (large inputs): lane-dense (tm, 128) row tiles streamed over an
# inner "arbitrary" reduction axis; a leading "parallel" axis shards row chunks
# across TensorCores (megacore / v7x). Each chunk keeps a vreg-sized (8,128)
# f32 accumulator (pure VPU adds -- no full-tile VMEM read-modify-write) and
# emits it as a partial-sum tile; the cross-lane reduce + focal finalize happen
# in the JAX wrapper.
# ---------------------------------------------------------------------------
def _tiled_call(num_rows, tm, num_par):
    assert num_rows % tm == 0
    num_tiles = num_rows // tm
    assert num_tiles % num_par == 0
    inner = num_tiles // num_par

    def kernel(o_ref, t_ref, out_ref, acc_ref):
        i = pl.program_id(1)

        @pl.when(i == 0)
        def _():
            acc_ref[...] = jnp.zeros_like(acc_ref)

        block = _bce_block(o_ref[...], t_ref[...])               # (tm, 128) f32
        # Fold sublane groups into one vreg-sized accumulator: elementwise vadds only.
        acc_ref[...] += block.reshape(tm // _SUBLANES, _SUBLANES, _LANES).sum(axis=0)

        @pl.when(i == inner - 1)
        def _():
            out_ref[...] = acc_ref[...].reshape(1, _SUBLANES, _LANES)

    in_spec = pl.BlockSpec((tm, _LANES), lambda p, i: (p * inner + i, 0))

    return pl.pallas_call(
        kernel,
        out_shape=jax.ShapeDtypeStruct((num_par, _SUBLANES, _LANES), jnp.float32),
        grid_spec=pltpu.PrefetchScalarGridSpec(
            num_scalar_prefetch=0,
            grid=(num_par, inner),
            in_specs=[in_spec, in_spec],
            out_specs=pl.BlockSpec((1, _SUBLANES, _LANES), lambda p, i: (p, 0, 0)),
            scratch_shapes=[pltpu.VMEM((_SUBLANES, _LANES), jnp.float32)],
        ),
        compiler_params=pltpu.CompilerParams(
            dimension_semantics=("parallel", "arbitrary"),
            vmem_limit_bytes=_VMEM_LIMIT,
        ),
    )


def _pad_flat(flat, multiple, pad_value):
    """Pad a 1-D stream to a multiple; pad elements contribute 0 to the BCE sum."""
    pad = (-flat.shape[0]) % multiple
    if pad:
        flat = jnp.concatenate(
            [flat, jnp.full((pad,), pad_value, dtype=flat.dtype)], axis=0)
    return flat


def focal_loss(output, target, gamma: int = 2):
    """JAX wrapper: lane-dense layout + Pallas partial sums + tiny finalize in JAX."""
    assert output.shape == target.shape
    total = output.size

    # Keep original dtypes: the kernel upcasts per tile, so narrow (e.g. bf16) targets
    # directly reduce HBM read traffic on mem-bound shapes.
    o_flat = output.reshape(-1)
    t_flat = target.reshape(-1)

    if total <= _SINGLE_BLOCK_MAX_ROWS * _LANES:
        o_flat = _pad_flat(o_flat, _LANES, 1.0)
        t_flat = _pad_flat(t_flat, _LANES, 1.0)
        m = o_flat.shape[0] // _LANES
        partials = _single_block_call((m, _LANES))(
            o_flat.reshape(m, _LANES), t_flat.reshape(m, _LANES))
    else:
        o_flat = _pad_flat(o_flat, _LANES * _TILE_ROWS, 1.0)
        t_flat = _pad_flat(t_flat, _LANES * _TILE_ROWS, 1.0)
        m = o_flat.shape[0] // _LANES
        num_tiles = m // _TILE_ROWS
        # Leading "parallel" chunk axis: lets Mosaic shard across TensorCores (v7x).
        num_par = next(p for p in (8, 4, 2, 1) if num_tiles % p == 0)
        partials = _tiled_call(m, _TILE_ROWS, num_par)(
            o_flat.reshape(m, _LANES), t_flat.reshape(m, _LANES))

    # Finalize outside the kernel (tiny): mean over the TRUE element count, then
    # the focal weighting  FL = (1 - 10**(-ce))**gamma * ce.
    ce = jnp.sum(partials) / jnp.float32(total)
    p = 1.0 - jnp.power(jnp.float32(10.0), -ce)
    return (p ** gamma) * ce


def focal_loss_ref(output, target, gamma: int = 2):
    """Pure-JAX reference matching torch semantics (for verification)."""
    o = output.astype(jnp.float32)
    t = target.astype(jnp.float32)
    log_o = jnp.maximum(jnp.log(o), -100.0)
    log_1mo = jnp.maximum(jnp.log(1.0 - o), -100.0)
    ce = jnp.mean(-(t * log_o + (1.0 - t) * log_1mo))
    p = 1.0 - 10.0 ** (-ce)
    return (p ** gamma) * ce


if __name__ == "__main__":
    key = jax.random.PRNGKey(0)
    k1, k2 = jax.random.split(key)

    # batch=2, seq=8, classes=32 -> probabilities in (0, 1) and binary targets.
    shape = (2, 8, 32)
    output = jax.nn.sigmoid(jax.random.normal(k1, shape, dtype=jnp.float32))
    target = (jax.random.uniform(k2, shape) < 0.5).astype(jnp.float32)

    fl = focal_loss(output, target)
    jax.block_until_ready(fl)

    ref = focal_loss_ref(output, target)
    assert jnp.allclose(fl, ref, rtol=1e-5, atol=1e-6), (fl, ref)

    print("KERNEL_OK")
</pallas_src>

<mosaic_0001>
module attributes {stable_mosaic.version = 11 : i64} {
  func.func @kernel(%arg0: i32, %arg1: memref<4x128xf32, #tpu.memory_space<vmem>>, %arg2: memref<4x128xf32, #tpu.memory_space<vmem>>, %arg3: memref<1x1xf32, #tpu.memory_space<smem>>) attributes {dimension_semantics = [#tpu.dimension_semantics<arbitrary>], iteration_bounds = array<i64: 1>, scalar_prefetch = 0 : i64, scratch_operands = 0 : i64, tpu.core_type = #tpu.core_type<tc>, window_params = [{pipeline_mode = #tpu.pipeline_mode<synchronous>, transform_indices = @transform_0, window_bounds = array<i64: 4, 128>}, {pipeline_mode = #tpu.pipeline_mode<synchronous>, transform_indices = @transform_1, window_bounds = array<i64: 4, 128>}, {transform_indices = @transform_2, window_bounds = array<i64: 1, 1>}]} {
    %c0 = arith.constant 0 : index
    %c0_0 = arith.constant 0 : index
    %0 = vector.load %arg1[%c0, %c0_0] : memref<4x128xf32, #tpu.memory_space<vmem>>, vector<4x128xf32>
    %c0_1 = arith.constant 0 : index
    %c0_2 = arith.constant 0 : index
    %1 = vector.load %arg2[%c0_1, %c0_2] : memref<4x128xf32, #tpu.memory_space<vmem>>, vector<4x128xf32>
    %2 = math.log %0 : vector<4x128xf32>
    %cst = arith.constant -1.000000e+02 : f32
    %3 = vector.broadcast %cst : f32 to vector<4x128xf32>
    %4 = arith.maximumf %2, %3 : vector<4x128xf32>
    %cst_3 = arith.constant 1.000000e+00 : f32
    %5 = vector.broadcast %cst_3 : f32 to vector<4x128xf32>
    %6 = arith.subf %5, %0 : vector<4x128xf32>
    %7 = math.log %6 : vector<4x128xf32>
    %cst_4 = arith.constant -1.000000e+02 : f32
    %8 = vector.broadcast %cst_4 : f32 to vector<4x128xf32>
    %9 = arith.maximumf %7, %8 : vector<4x128xf32>
    %10 = arith.subf %4, %9 : vector<4x128xf32>
    %11 = arith.mulf %1, %10 : vector<4x128xf32>
    %12 = arith.addf %11, %9 : vector<4x128xf32>
    %cst_5 = arith.constant 0.000000e+00 : f32
    %13 = vector.broadcast %cst_5 : f32 to vector<4x128xf32>
    %14 = arith.subf %13, %12 : vector<4x128xf32>
    %15 = vector.shape_cast %14 : vector<4x128xf32> to vector<1x4x128xf32>
    %cst_6 = arith.constant dense<0.000000e+00> : vector<1xf32>
    %16 = vector.multi_reduction <add>, %15, %cst_6 [1, 2] : vector<1x4x128xf32> to vector<1xf32>
    %17 = vector.shape_cast %16 : vector<1xf32> to vector<1x1x1xf32>
    %18 = vector.extract %17[0, 0, 0] : f32 from vector<1x1x1xf32>
    %c0_7 = arith.constant 0 : index
    %c0_8 = arith.constant 0 : index
    %19 = memref.load %arg3[%c0_7, %c0_8] : memref<1x1xf32, #tpu.memory_space<smem>>
    memref.store %18, %arg3[%c0_7, %c0_8] : memref<1x1xf32, #tpu.memory_space<smem>>
    return
  }
  func.func @transform_0(%arg0: i32) -> (i32, i32) {
    %c0_i32 = arith.constant 0 : i32
    %c0_i32_0 = arith.constant 0 : i32
    %c0_i32_1 = arith.constant 0 : i32
    return %c0_i32, %c0_i32_0 : i32, i32
  }
  func.func @transform_1(%arg0: i32) -> (i32, i32) {
    %c0_i32 = arith.constant 0 : i32
    %c0_i32_0 = arith.constant 0 : i32
    %c0_i32_1 = arith.constant 0 : i32
    return %c0_i32, %c0_i32_0 : i32, i32
  }
  func.func @transform_2(%arg0: i32) -> (i32, i32) {
    %c0_i32 = arith.constant 0 : i32
    %c0_i32_0 = arith.constant 0 : i32
    %c0_i32_1 = arith.constant 0 : i32
    return %c0_i32, %c0_i32_0 : i32, i32
  }
}

</mosaic_0001>

<llo_original>
// kernel: tpu_custom_call.1
$region0: #{tpu_custom_call.1}
  #allocation0 [shape = 'u32[]', space=smem, size = 0x4, offset = 0x4, fixed_abs, tag = 'smem constant byte address 0x4 - core index']
  #allocation1 [shape = 'u32[144,128]{1,0:T(1,128)}', space=vmem, size = 0x12000, scoped, tag = 'internal scratch']
  %s0 = inlined_call_operand.hbm [shape: f32[4,128], index: 0, kind: input, shape index: {}]
  %s1 = inlined_call_operand.hbm [shape: f32[4,128], index: 1, kind: input, shape index: {}]
  %s2 = inlined_call_operand.hbm [shape: f32[1,1], index: 2, kind: output, shape index: {}]
  %s3 = sld [smem:[#allocation0]]
  $region26: #{tpu_custom_call.1} parent=0
    _
  %s5 = ssub.s32 1, %s3
  %s6 = scalar_select 0, %s5, %s3
  $region1: #{tpu_custom_call.1} parent=0
    #allocation2 [shape = 'u8[2048]{0}', space=vmem, size = 0x800, scoped, tag = 'input window, operand 0, single buffered']
    #allocation3 [shape = 's32[1]{0}', space=sflag, size = 0x4, scoped, tag = 'scoped memory for tpu_custom_call.1']
    #allocation4 [shape = 's32[1]{0}', space=sflag, size = 0x4, scoped, tag = 'scoped memory for tpu_custom_call.1']
    #allocation5 [shape = 'u8[2048]{0}', space=vmem, size = 0x800, scoped, tag = 'input window, operand 1, single buffered']
    #allocation6 [shape = 's32[1]{0}', space=sflag, size = 0x4, scoped, tag = 'scoped memory for tpu_custom_call.1']
    #allocation7 [shape = 'u8[512]{0}', space=smem, size = 0x200, scoped, tag = 'output window, operand 0, single buffered']
    %7 = vsyncpa [#allocation3], 0
    %8 = vsyncpa [#allocation6], 0
    %9 = vsyncpa [#allocation4], 0
    // Predicated region
    $region2: #{tpu_custom_call.1} parent=1 // pred_check
      _
    $region3: #{tpu_custom_call.1} parent=1 // pred_check_branch
      %11 = sbr.rel (0) target = $region5
    $region4: #{tpu_custom_call.1} parent=1 // pred_region
      %s13 = ssub.s32 64, 64
      %14 = vsyncadd [#allocation3], %s13
      %s16 = sshll.u32 [#allocation2], 4
      %s17 = int_to_ptr.vmem [resolvable:$true] %s16
      %19 = dma.hbm_to_vmem [thread:$0]  %s0, 64, %s17, [#allocation3]
    $region5: #{tpu_custom_call.1} parent=1 // pred_fallthru
      _
    // Predicated region
    $region6: #{tpu_custom_call.1} parent=1 // pred_check
      _
    $region7: #{tpu_custom_call.1} parent=1 // pred_check_branch
      %21 = sbr.rel (0) target = $region9
    $region8: #{tpu_custom_call.1} parent=1 // pred_region
      %s23 = ssub.s32 64, 64
      %24 = vsyncadd [#allocation6], %s23
      %s26 = sshll.u32 [#allocation5], 4
      %s27 = int_to_ptr.vmem [resolvable:$true] %s26
      %29 = dma.hbm_to_vmem [thread:$0]  %s1, 64, %s27, [#allocation6]
    $region9: #{tpu_custom_call.1} parent=1 // pred_fallthru
      _
    // Predicated region
    $region10: #{tpu_custom_call.1} parent=1 // pred_check
      _
    $region11: #{tpu_custom_call.1} parent=1 // pred_check_branch
      %31 = sbr.rel (0) target = $region13
    $region12: #{tpu_custom_call.1} parent=1 // pred_region
      %32 = dma.done [#allocation3], 64
    $region13: #{tpu_custom_call.1} parent=1 // pred_fallthru
      _
    // Predicated region
    $region14: #{tpu_custom_call.1} parent=1 // pred_check
      _
    $region15: #{tpu_custom_call.1} parent=1 // pred_check_branch
      %34 = sbr.rel (0) target = $region17
    $region16: #{tpu_custom_call.1} parent=1 // pred_region
      %35 = dma.done [#allocation6], 64
    $region17: #{tpu_custom_call.1} parent=1 // pred_fallthru
      _
    %v36 = vld [vmem:[#allocation2] sm:$0xf]
    %v37 = vld [vmem:[#allocation5] sm:$0xf]
    %v38 = vlog2.pop %v36
    %v39 = vmul.f32 %v38, 0.6931472
    %v40 = vmax.f32 %v39, -100.0
    %v41 = vsub.f32 1.0, %v36
    %v42 = vlog2.pop %v41
    %v43 = vmul.f32 %v42, 0.6931472
    %v44 = vmax.f32 %v43, -100.0
    %v45 = vsub.f32 %v40, %v44
    %v46 = vmul.f32 %v37, %v45
    %v47 = vadd.f32 %v46, %v44
    %v48 = vsub.f32 0.0, %v47
    %vm49 = vcmask 1043456
    %v50 = vsel %vm49, %v48, 0.0
    %51 = vadd.xlane.f32.xlu0 %v50
    %v52 = vpop.xlane.xlu0 %51
    %v53 = vrot.slane %v52, 4
    %v54 = vadd.f32 %v52, %v53
    %v55 = vrot.slane %v54, 2
    %v56 = vadd.f32 %v54, %v55
    %v57 = vrot.slane %v56, 1
    %v58 = vadd.f32 %v56, %v57
    %s59 = vtos %v58
    %s60 = scalar_lea.smem [#allocation7], 0
    %61 = sst [smem:[%s60]] %s59
    // Predicated region
    $region18: #{tpu_custom_call.1} parent=1 // pred_check
      _
    $region19: #{tpu_custom_call.1} parent=1 // pred_check_branch
      %63 = sbr.rel (0) target = $region21
    $region20: #{tpu_custom_call.1} parent=1 // pred_region
      %s65 = ssub.s32 16, 16
      %66 = vsyncadd [#allocation4], %s65
      %69 = dma.smem_to_hbm [#allocation7], 16, %s2, [#allocation4]
    $region21: #{tpu_custom_call.1} parent=1 // pred_fallthru
      _
    // Predicated region
    $region22: #{tpu_custom_call.1} parent=1 // pred_check
      _
    $region23: #{tpu_custom_call.1} parent=1 // pred_check_branch
      %71 = sbr.rel (0) target = $region25
    $region24: #{tpu_custom_call.1} parent=1 // pred_region
      %72 = dma.done [#allocation4], 16
    $region25: #{tpu_custom_call.1} parent=1 // pred_fallthru
      _
    %73 = sfence
    %74 = vsyncpa [#allocation3], 1
    %75 = vsyncpa [#allocation6], 1
    %76 = vsyncpa [#allocation4], 1

</llo_original>
